<compile_context>
chip_gen: v5e
topology: v5e:2x2
jax: 0.10.0
libtpu: 0.0.40
codegen_flags: <defaults>
</compile_context>

<pallas_src>
import functools

import jax
import jax.numpy as jnp
from jax.experimental import pallas as pl
from jax.experimental.pallas import tpu as pltpu

VMEM = pltpu.MemorySpace.VMEM


# ----------------------------- fused Pallas kernel -----------------------------

def crnn_fused_kernel(patches_ref, wgi_ref, bgi_ref, whh_ref, bhh_ref,
                      w1_ref, b1_ref, w2_ref, b2_ref, wc_ref, bc_ref,
                      o_ref, g_ref, *, Tp, B, H):
    """Fused conv(im2col) -> GRU -> attention -> classifier.

    patches: (Tp*B, Fp*KH*KW)  time-major im2col patches
    wgi:     (Fp*KH*KW, 3H)    conv weights folded into the GRU input projection
    bgi:     (1, 3H)           b_ih + conv bias folded through W_ih
    whh:     (H, 3H)  bhh: (1, 3H)
    w1: (H, K) b1: (1, K) w2: (K, 1) b2: (1, 1)   attention MLP
    wc: (H, C) bc: (1, C)                          classifier
    o:  (B, C)
    g_ref: VMEM scratch (Tp, B, H) holding the GRU hidden sequence.
    """
    # ---- conv + GRU input projection for every timestep, hoisted off the serial path ----
    gi_all = jnp.dot(patches_ref[...], wgi_ref[...],
                     preferred_element_type=jnp.float32) + bgi_ref[...]     # (Tp*B, 3H)

    whh = whh_ref[...]
    bhh = bhh_ref[...]

    # ---- unrolled GRU recurrence (PyTorch gate order [r, z, n]) ----
    h = jnp.zeros((B, H), jnp.float32)            # hidden_state=None -> zeros
    for t in range(Tp):                           # Tp is a small compile-time constant
        gi = gi_all[t * B:(t + 1) * B, :]         # (B, 3H) - static slice
        gh = jnp.dot(h, whh, preferred_element_type=jnp.float32) + bhh
        i_r, i_z, i_n = gi[:, 0:H], gi[:, H:2 * H], gi[:, 2 * H:3 * H]
        h_r, h_z, h_n = gh[:, 0:H], gh[:, H:2 * H], gh[:, 2 * H:3 * H]
        r = jax.nn.sigmoid(i_r + h_r)
        z = jax.nn.sigmoid(i_z + h_z)
        n = jnp.tanh(i_n + r * h_n)
        h = (1.0 - z) * n + z * h
        g_ref[t] = h

    g = g_ref[...]                                # (Tp, B, H), stays in VMEM

    # ---- attention: softmax over time (axis 0) ----
    e1 = jnp.tanh(jnp.einsum("tbh,hk->tbk", g, w1_ref[...],
                             preferred_element_type=jnp.float32) + b1_ref[...])
    e = jnp.einsum("tbk,ko->tbo", e1, w2_ref[...],
                   preferred_element_type=jnp.float32) + b2_ref[...]        # (Tp, B, 1)
    e_max = jnp.max(e, axis=0, keepdims=True)
    p = jnp.exp(e - e_max)
    alpha = p * pl.reciprocal(jnp.sum(p, axis=0, keepdims=True), approx=True)
    ctx = jnp.sum(g * alpha, axis=0)              # (B, H)

    # ---- classifier ----
    o_ref[...] = jnp.dot(ctx, wc_ref[...],
                         preferred_element_type=jnp.float32) + bc_ref[...]


def pallas_crnn(patches, wgi, bgi, whh_t, bhh, w1_t, b1, w2_t, b2, wc_t, bc,
                *, Tp, B, H, num_classes):
    kernel = functools.partial(crnn_fused_kernel, Tp=Tp, B=B, H=H)
    return pl.pallas_call(
        kernel,
        out_shape=jax.ShapeDtypeStruct((B, num_classes), jnp.float32),
        in_specs=[pl.BlockSpec(memory_space=VMEM)] * 11,
        out_specs=pl.BlockSpec(memory_space=VMEM),
        scratch_shapes=[pltpu.VMEM((Tp, B, H), jnp.float32)],
        # TODO(synk): for large B on v7x, add a grid over batch with
        # dimension_semantics=("parallel",) to shard the recurrence over both TensorCores.
    )(patches, wgi, bgi, whh_t, bhh, w1_t, b1, w2_t, b2, wc_t, bc)


# ----------------------------- model glue -----------------------------

class Config:
    n_mels = 16
    kernel_size = (4, 4)
    stride = (2, 2)
    cnn_out_channels = 4
    hidden_size = 32
    gru_num_layers = 1       # TODO(synk): multi-layer / bidirectional GRU variants not implemented
    bidirectional = False
    bottleneck_size = 16
    num_classes = 4


def init_params(key, cfg):
    KH, KW = cfg.kernel_size
    Fp = (cfg.n_mels - KH) // cfg.stride[0] + 1
    I = Fp * cfg.cnn_out_channels
    H = cfg.hidden_size
    ks = jax.random.split(key, 12)

    def u(k, shape, scale):
        return jax.random.uniform(k, shape, jnp.float32, -scale, scale)

    return {
        "conv_w": u(ks[0], (cfg.cnn_out_channels, 1, KH, KW), (KH * KW) ** -0.5),
        "conv_b": u(ks[1], (cfg.cnn_out_channels,), (KH * KW) ** -0.5),
        "w_ih":   u(ks[2], (3 * H, I), H ** -0.5),
        "w_hh":   u(ks[3], (3 * H, H), H ** -0.5),
        "b_ih":   u(ks[4], (3 * H,), H ** -0.5),
        "b_hh":   u(ks[5], (3 * H,), H ** -0.5),
        "attn_w1": u(ks[6], (cfg.bottleneck_size, H), H ** -0.5),
        "attn_b1": u(ks[7], (cfg.bottleneck_size,), H ** -0.5),
        "attn_w2": u(ks[8], (1, cfg.bottleneck_size), cfg.bottleneck_size ** -0.5),
        "attn_b2": u(ks[9], (1,), cfg.bottleneck_size ** -0.5),
        "cls_w":  u(ks[10], (cfg.num_classes, H), H ** -0.5),
        "cls_b":  u(ks[11], (cfg.num_classes,), H ** -0.5),
    }


def crnn_forward(params, x, cfg):
    # x: (B, n_mels, T)  (the PyTorch input before unsqueeze(1))
    B, n_mels, T = x.shape
    KH, KW = cfg.kernel_size
    sH, sW = cfg.stride
    C = cfg.cnn_out_channels
    Fp = (n_mels - KH) // sH + 1
    Tp = (T - KW) // sW + 1
    H = cfg.hidden_size
    K3 = KH * KW

    # im2col patches, built directly in time-major order so no transpose is needed later:
    #   patches[t*B + b, f*K3 + kh*KW + kw] = x[b, f*sH + kh, t*sW + kw]
    cols = []
    for kh in range(KH):
        for kw in range(KW):
            cols.append(x[:, kh:kh + sH * (Fp - 1) + 1:sH, kw:kw + sW * (Tp - 1) + 1:sW])
    patches = jnp.stack(cols, axis=-1)                     # (B, Fp, Tp, K3)
    patches = jnp.transpose(patches, (2, 0, 1, 3))         # (Tp, B, Fp, K3)
    patches = patches.reshape(Tp * B, Fp * K3)

    # Fold the conv into the GRU input projection (tiny, fused by XLA; could be hoisted
    # out of the per-call path entirely since it only depends on the weights).
    #   W_comb[f*K3 + k, j] = sum_c conv_w[c, k] * W_ih[j, c*Fp + f]
    #   b_comb[j]           = b_ih[j] + sum_{c,f} conv_b[c] * W_ih[j, c*Fp + f]
    cw = params["conv_w"].reshape(C, K3)                   # (C, K3)
    wih_r = params["w_ih"].reshape(3 * H, C, Fp)           # (3H, C, Fp); feature = c*Fp + f
    w_gi = jnp.einsum("ck,jcf->fkj", cw, wih_r).reshape(Fp * K3, 3 * H)
    b_gi = params["b_ih"] + jnp.einsum("c,jcf->j", params["conv_b"], wih_r)

    out = pallas_crnn(
        patches, w_gi, b_gi.reshape(1, -1),
        params["w_hh"].T, params["b_hh"].reshape(1, -1),
        params["attn_w1"].T, params["attn_b1"].reshape(1, -1),
        params["attn_w2"].T, params["attn_b2"].reshape(1, 1),
        params["cls_w"].T, params["cls_b"].reshape(1, -1),
        Tp=Tp, B=B, H=H, num_classes=cfg.num_classes)
    return out, jnp.array(0)                               # matches (output, torch.tensor(0))


def crnn_reference(params, x, cfg):
    # pure-JAX reference of the PyTorch forward (for verification), at HIGHEST matmul precision
    HP = jax.lax.Precision.HIGHEST
    KH, KW = cfg.kernel_size
    sH, sW = cfg.stride
    C, H = cfg.cnn_out_channels, cfg.hidden_size
    x4 = x[:, None, :, :]
    conv = jax.lax.conv_general_dilated(
        x4, params["conv_w"], window_strides=(sH, sW), padding="VALID",
        dimension_numbers=("NCHW", "OIHW", "NCHW"), precision=HP)
    conv = conv + params["conv_b"][None, :, None, None]    # (B, C, Fp, Tp)
    B_, _, Fp, Tp = conv.shape
    seq = jnp.transpose(conv.reshape(B_, C * Fp, Tp), (0, 2, 1))   # (B, Tp, C*Fp)

    def cell(h, x_t):
        gi = jnp.dot(x_t, params["w_ih"].T, precision=HP) + params["b_ih"]
        gh = jnp.dot(h, params["w_hh"].T, precision=HP) + params["b_hh"]
        i_r, i_z, i_n = jnp.split(gi, 3, axis=-1)
        h_r, h_z, h_n = jnp.split(gh, 3, axis=-1)
        r = jax.nn.sigmoid(i_r + h_r)
        z = jax.nn.sigmoid(i_z + h_z)
        n = jnp.tanh(i_n + r * h_n)
        h_new = (1 - z) * n + z * h
        return h_new, h_new

    h0 = jnp.zeros((B_, H), jnp.float32)
    _, outs = jax.lax.scan(cell, h0, jnp.transpose(seq, (1, 0, 2)))
    g = jnp.transpose(outs, (1, 0, 2))                     # (B, Tp, H)
    e1 = jnp.tanh(jnp.dot(g, params["attn_w1"].T, precision=HP) + params["attn_b1"])
    e = jnp.dot(e1, params["attn_w2"].T, precision=HP) + params["attn_b2"]
    alpha = jax.nn.softmax(e, axis=-2)
    ctx = (g * alpha).sum(axis=-2)
    return jnp.dot(ctx, params["cls_w"].T, precision=HP) + params["cls_b"]


if __name__ == "__main__":
    cfg = Config()
    key = jax.random.PRNGKey(0)
    pkey, xkey = jax.random.split(key)
    params = init_params(pkey, cfg)

    x = jax.random.normal(xkey, (2, cfg.n_mels, 16), jnp.float32)   # (B, n_mels, T)

    fwd = jax.jit(functools.partial(crnn_forward, cfg=cfg))
    out, zero = fwd(params, x)
    out = jax.block_until_ready(out)

    ref = crnn_reference(params, x, cfg)
    assert out.shape == (2, cfg.num_classes), out.shape
    assert jnp.allclose(out, ref, atol=2e-2, rtol=2e-2), (out, ref)
    print("KERNEL_OK")
</pallas_src>

<mosaic_0001>
module attributes {stable_mosaic.version = 11 : i64} {
  func.func @crnn_fused_kernel(%arg0: memref<14x112xf32, #tpu.memory_space<vmem>>, %arg1: memref<112x96xf32, #tpu.memory_space<vmem>>, %arg2: memref<1x96xf32, #tpu.memory_space<vmem>>, %arg3: memref<32x96xf32, #tpu.memory_space<vmem>>, %arg4: memref<1x96xf32, #tpu.memory_space<vmem>>, %arg5: memref<32x16xf32, #tpu.memory_space<vmem>>, %arg6: memref<1x16xf32, #tpu.memory_space<vmem>>, %arg7: memref<16x1xf32, #tpu.memory_space<vmem>>, %arg8: memref<1x1xf32, #tpu.memory_space<vmem>>, %arg9: memref<32x4xf32, #tpu.memory_space<vmem>>, %arg10: memref<1x4xf32, #tpu.memory_space<vmem>>, %arg11: memref<2x4xf32, #tpu.memory_space<vmem>>, %arg12: memref<7x2x32xf32, #tpu.memory_space<vmem>>) attributes {dimension_semantics = [], scalar_prefetch = 0 : i64, scratch_operands = 1 : i64, tpu.core_type = #tpu.core_type<tc>} {
    %c0 = arith.constant 0 : index
    %c0_0 = arith.constant 0 : index
    %0 = vector.load %arg0[%c0, %c0_0] : memref<14x112xf32, #tpu.memory_space<vmem>>, vector<14x112xf32>
    %c0_1 = arith.constant 0 : index
    %c0_2 = arith.constant 0 : index
    %1 = vector.load %arg1[%c0_1, %c0_2] : memref<112x96xf32, #tpu.memory_space<vmem>>, vector<112x96xf32>
    %cst = arith.constant dense<0.000000e+00> : vector<14x96xf32>
    %2 = tpu.matmul %0, %1, %cst {dimension_numbers = #tpu.dot_dimension_numbers<[1], [0], [0], [1], [0, 0, 1, 1], [], []>} : vector<14x112xf32>, vector<112x96xf32>, vector<14x96xf32> -> vector<14x96xf32>
    %c0_3 = arith.constant 0 : index
    %c0_4 = arith.constant 0 : index
    %3 = vector.load %arg2[%c0_3, %c0_4] : memref<1x96xf32, #tpu.memory_space<vmem>>, vector<1x96xf32>
    %4 = vector.broadcast %3 : vector<1x96xf32> to vector<14x96xf32>
    %5 = arith.addf %2, %4 : vector<14x96xf32>
    %c0_5 = arith.constant 0 : index
    %c0_6 = arith.constant 0 : index
    %6 = vector.load %arg3[%c0_5, %c0_6] : memref<32x96xf32, #tpu.memory_space<vmem>>, vector<32x96xf32>
    %c0_7 = arith.constant 0 : index
    %c0_8 = arith.constant 0 : index
    %7 = vector.load %arg4[%c0_7, %c0_8] : memref<1x96xf32, #tpu.memory_space<vmem>>, vector<1x96xf32>
    %cst_9 = arith.constant 0.000000e+00 : f32
    %8 = vector.broadcast %cst_9 : f32 to vector<2x32xf32>
    %9 = vector.extract_strided_slice %5 {offsets = [0, 0], sizes = [2, 96], strides = [1, 1]} : vector<14x96xf32> to vector<2x96xf32>
    %cst_10 = arith.constant dense<0.000000e+00> : vector<2x96xf32>
    %10 = tpu.matmul %8, %6, %cst_10 {dimension_numbers = #tpu.dot_dimension_numbers<[1], [0], [0], [1], [0, 0, 1, 1], [], []>} : vector<2x32xf32>, vector<32x96xf32>, vector<2x96xf32> -> vector<2x96xf32>
    %11 = vector.broadcast %7 : vector<1x96xf32> to vector<2x96xf32>
    %12 = arith.addf %10, %11 : vector<2x96xf32>
    %13 = vector.extract_strided_slice %9 {offsets = [0, 0], sizes = [2, 32], strides = [1, 1]} : vector<2x96xf32> to vector<2x32xf32>
    %14 = vector.extract_strided_slice %9 {offsets = [0, 32], sizes = [2, 32], strides = [1, 1]} : vector<2x96xf32> to vector<2x32xf32>
    %15 = vector.extract_strided_slice %9 {offsets = [0, 64], sizes = [2, 32], strides = [1, 1]} : vector<2x96xf32> to vector<2x32xf32>
    %16 = vector.extract_strided_slice %12 {offsets = [0, 0], sizes = [2, 32], strides = [1, 1]} : vector<2x96xf32> to vector<2x32xf32>
    %17 = vector.extract_strided_slice %12 {offsets = [0, 32], sizes = [2, 32], strides = [1, 1]} : vector<2x96xf32> to vector<2x32xf32>
    %18 = vector.extract_strided_slice %12 {offsets = [0, 64], sizes = [2, 32], strides = [1, 1]} : vector<2x96xf32> to vector<2x32xf32>
    %19 = arith.addf %13, %16 : vector<2x32xf32>
    %20 = arith.negf %19 : vector<2x32xf32>
    %21 = math.exp %20 : vector<2x32xf32>
    %cst_11 = arith.constant 1.000000e+00 : f32
    %22 = vector.broadcast %cst_11 : f32 to vector<2x32xf32>
    %23 = arith.addf %22, %21 : vector<2x32xf32>
    %24 = arith.divf %22, %23 : vector<2x32xf32>
    %25 = arith.addf %14, %17 : vector<2x32xf32>
    %26 = arith.negf %25 : vector<2x32xf32>
    %27 = math.exp %26 : vector<2x32xf32>
    %cst_12 = arith.constant 1.000000e+00 : f32
    %28 = vector.broadcast %cst_12 : f32 to vector<2x32xf32>
    %29 = arith.addf %28, %27 : vector<2x32xf32>
    %30 = arith.divf %28, %29 : vector<2x32xf32>
    %31 = arith.mulf %24, %18 : vector<2x32xf32>
    %32 = arith.addf %15, %31 : vector<2x32xf32>
    %33 = math.tanh %32 : vector<2x32xf32>
    %cst_13 = arith.constant 1.000000e+00 : f32
    %34 = vector.broadcast %cst_13 : f32 to vector<2x32xf32>
    %35 = arith.subf %34, %30 : vector<2x32xf32>
    %36 = arith.mulf %35, %33 : vector<2x32xf32>
    %37 = arith.mulf %30, %8 : vector<2x32xf32>
    %38 = arith.addf %36, %37 : vector<2x32xf32>
    %c0_14 = arith.constant 0 : index
    %c0_15 = arith.constant 0 : index
    %c0_16 = arith.constant 0 : index
    %39 = vector.load %arg12[%c0_14, %c0_15, %c0_16] : memref<7x2x32xf32, #tpu.memory_space<vmem>>, vector<1x2x32xf32>
    %40 = vector.shape_cast %39 : vector<1x2x32xf32> to vector<2x32xf32>
    %41 = vector.shape_cast %38 : vector<2x32xf32> to vector<1x2x32xf32>
    tpu.vector_store %arg12[%c0_14, %c0_15, %c0_16], %41 {strides = array<i32>} : memref<7x2x32xf32, #tpu.memory_space<vmem>>, vector<1x2x32xf32>,
    %42 = vector.extract_strided_slice %5 {offsets = [2, 0], sizes = [2, 96], strides = [1, 1]} : vector<14x96xf32> to vector<2x96xf32>
    %cst_17 = arith.constant dense<0.000000e+00> : vector<2x96xf32>
    %43 = tpu.matmul %38, %6, %cst_17 {dimension_numbers = #tpu.dot_dimension_numbers<[1], [0], [0], [1], [0, 0, 1, 1], [], []>} : vector<2x32xf32>, vector<32x96xf32>, vector<2x96xf32> -> vector<2x96xf32>
    %44 = vector.broadcast %7 : vector<1x96xf32> to vector<2x96xf32>
    %45 = arith.addf %43, %44 : vector<2x96xf32>
    %46 = vector.extract_strided_slice %42 {offsets = [0, 0], sizes = [2, 32], strides = [1, 1]} : vector<2x96xf32> to vector<2x32xf32>
    %47 = vector.extract_strided_slice %42 {offsets = [0, 32], sizes = [2, 32], strides = [1, 1]} : vector<2x96xf32> to vector<2x32xf32>
    %48 = vector.extract_strided_slice %42 {offsets = [0, 64], sizes = [2, 32], strides = [1, 1]} : vector<2x96xf32> to vector<2x32xf32>
    %49 = vector.extract_strided_slice %45 {offsets = [0, 0], sizes = [2, 32], strides = [1, 1]} : vector<2x96xf32> to vector<2x32xf32>
    %50 = vector.extract_strided_slice %45 {offsets = [0, 32], sizes = [2, 32], strides = [1, 1]} : vector<2x96xf32> to vector<2x32xf32>
    %51 = vector.extract_strided_slice %45 {offsets = [0, 64], sizes = [2, 32], strides = [1, 1]} : vector<2x96xf32> to vector<2x32xf32>
    %52 = arith.addf %46, %49 : vector<2x32xf32>
    %53 = arith.negf %52 : vector<2x32xf32>
    %54 = math.exp %53 : vector<2x32xf32>
    %cst_18 = arith.constant 1.000000e+00 : f32
    %55 = vector.broadcast %cst_18 : f32 to vector<2x32xf32>
    %56 = arith.addf %55, %54 : vector<2x32xf32>
    %57 = arith.divf %55, %56 : vector<2x32xf32>
    %58 = arith.addf %47, %50 : vector<2x32xf32>
    %59 = arith.negf %58 : vector<2x32xf32>
    %60 = math.exp %59 : vector<2x32xf32>
    %cst_19 = arith.constant 1.000000e+00 : f32
    %61 = vector.broadcast %cst_19 : f32 to vector<2x32xf32>
    %62 = arith.addf %61, %60 : vector<2x32xf32>
    %63 = arith.divf %61, %62 : vector<2x32xf32>
    %64 = arith.mulf %57, %51 : vector<2x32xf32>
    %65 = arith.addf %48, %64 : vector<2x32xf32>
    %66 = math.tanh %65 : vector<2x32xf32>
    %cst_20 = arith.constant 1.000000e+00 : f32
    %67 = vector.broadcast %cst_20 : f32 to vector<2x32xf32>
    %68 = arith.subf %67, %63 : vector<2x32xf32>
    %69 = arith.mulf %68, %66 : vector<2x32xf32>
    %70 = arith.mulf %63, %38 : vector<2x32xf32>
    %71 = arith.addf %69, %70 : vector<2x32xf32>
    %c1 = arith.constant 1 : index
    %c0_21 = arith.constant 0 : index
    %c0_22 = arith.constant 0 : index
    %72 = vector.load %arg12[%c1, %c0_21, %c0_22] : memref<7x2x32xf32, #tpu.memory_space<vmem>>, vector<1x2x32xf32>
    %73 = vector.shape_cast %72 : vector<1x2x32xf32> to vector<2x32xf32>
    %74 = vector.shape_cast %71 : vector<2x32xf32> to vector<1x2x32xf32>
    tpu.vector_store %arg12[%c1, %c0_21, %c0_22], %74 {strides = array<i32>} : memref<7x2x32xf32, #tpu.memory_space<vmem>>, vector<1x2x32xf32>,
    %75 = vector.extract_strided_slice %5 {offsets = [4, 0], sizes = [2, 96], strides = [1, 1]} : vector<14x96xf32> to vector<2x96xf32>
    %cst_23 = arith.constant dense<0.000000e+00> : vector<2x96xf32>
    %76 = tpu.matmul %71, %6, %cst_23 {dimension_numbers = #tpu.dot_dimension_numbers<[1], [0], [0], [1], [0, 0, 1, 1], [], []>} : vector<2x32xf32>, vector<32x96xf32>, vector<2x96xf32> -> vector<2x96xf32>
    %77 = vector.broadcast %7 : vector<1x96xf32> to vector<2x96xf32>
    %78 = arith.addf %76, %77 : vector<2x96xf32>
    %79 = vector.extract_strided_slice %75 {offsets = [0, 0], sizes = [2, 32], strides = [1, 1]} : vector<2x96xf32> to vector<2x32xf32>
    %80 = vector.extract_strided_slice %75 {offsets = [0, 32], sizes = [2, 32], strides = [1, 1]} : vector<2x96xf32> to vector<2x32xf32>
    %81 = vector.extract_strided_slice %75 {offsets = [0, 64], sizes = [2, 32], strides = [1, 1]} : vector<2x96xf32> to vector<2x32xf32>
    %82 = vector.extract_strided_slice %78 {offsets = [0, 0], sizes = [2, 32], strides = [1, 1]} : vector<2x96xf32> to vector<2x32xf32>
    %83 = vector.extract_strided_slice %78 {offsets = [0, 32], sizes = [2, 32], strides = [1, 1]} : vector<2x96xf32> to vector<2x32xf32>
    %84 = vector.extract_strided_slice %78 {offsets = [0, 64], sizes = [2, 32], strides = [1, 1]} : vector<2x96xf32> to vector<2x32xf32>
    %85 = arith.addf %79, %82 : vector<2x32xf32>
    %86 = arith.negf %85 : vector<2x32xf32>
    %87 = math.exp %86 : vector<2x32xf32>
    %cst_24 = arith.constant 1.000000e+00 : f32
    %88 = vector.broadcast %cst_24 : f32 to vector<2x32xf32>
    %89 = arith.addf %88, %87 : vector<2x32xf32>
    %90 = arith.divf %88, %89 : vector<2x32xf32>
    %91 = arith.addf %80, %83 : vector<2x32xf32>
    %92 = arith.negf %91 : vector<2x32xf32>
    %93 = math.exp %92 : vector<2x32xf32>
    %cst_25 = arith.constant 1.000000e+00 : f32
    %94 = vector.broadcast %cst_25 : f32 to vector<2x32xf32>
    %95 = arith.addf %94, %93 : vector<2x32xf32>
    %96 = arith.divf %94, %95 : vector<2x32xf32>
    %97 = arith.mulf %90, %84 : vector<2x32xf32>
    %98 = arith.addf %81, %97 : vector<2x32xf32>
    %99 = math.tanh %98 : vector<2x32xf32>
    %cst_26 = arith.constant 1.000000e+00 : f32
    %100 = vector.broadcast %cst_26 : f32 to vector<2x32xf32>
    %101 = arith.subf %100, %96 : vector<2x32xf32>
    %102 = arith.mulf %101, %99 : vector<2x32xf32>
    %103 = arith.mulf %96, %71 : vector<2x32xf32>
    %104 = arith.addf %102, %103 : vector<2x32xf32>
    %c2 = arith.constant 2 : index
    %c0_27 = arith.constant 0 : index
    %c0_28 = arith.constant 0 : index
    %105 = vector.load %arg12[%c2, %c0_27, %c0_28] : memref<7x2x32xf32, #tpu.memory_space<vmem>>, vector<1x2x32xf32>
    %106 = vector.shape_cast %105 : vector<1x2x32xf32> to vector<2x32xf32>
    %107 = vector.shape_cast %104 : vector<2x32xf32> to vector<1x2x32xf32>
    tpu.vector_store %arg12[%c2, %c0_27, %c0_28], %107 {strides = array<i32>} : memref<7x2x32xf32, #tpu.memory_space<vmem>>, vector<1x2x32xf32>,
    %108 = vector.extract_strided_slice %5 {offsets = [6, 0], sizes = [2, 96], strides = [1, 1]} : vector<14x96xf32> to vector<2x96xf32>
    %cst_29 = arith.constant dense<0.000000e+00> : vector<2x96xf32>
    %109 = tpu.matmul %104, %6, %cst_29 {dimension_numbers = #tpu.dot_dimension_numbers<[1], [0], [0], [1], [0, 0, 1, 1], [], []>} : vector<2x32xf32>, vector<32x96xf32>, vector<2x96xf32> -> vector<2x96xf32>
    %110 = vector.broadcast %7 : vector<1x96xf32> to vector<2x96xf32>
    %111 = arith.addf %109, %110 : vector<2x96xf32>
    %112 = vector.extract_strided_slice %108 {offsets = [0, 0], sizes = [2, 32], strides = [1, 1]} : vector<2x96xf32> to vector<2x32xf32>
    %113 = vector.extract_strided_slice %108 {offsets = [0, 32], sizes = [2, 32], strides = [1, 1]} : vector<2x96xf32> to vector<2x32xf32>
    %114 = vector.extract_strided_slice %108 {offsets = [0, 64], sizes = [2, 32], strides = [1, 1]} : vector<2x96xf32> to vector<2x32xf32>
    %115 = vector.extract_strided_slice %111 {offsets = [0, 0], sizes = [2, 32], strides = [1, 1]} : vector<2x96xf32> to vector<2x32xf32>
    %116 = vector.extract_strided_slice %111 {offsets = [0, 32], sizes = [2, 32], strides = [1, 1]} : vector<2x96xf32> to vector<2x32xf32>
    %117 = vector.extract_strided_slice %111 {offsets = [0, 64], sizes = [2, 32], strides = [1, 1]} : vector<2x96xf32> to vector<2x32xf32>
    %118 = arith.addf %112, %115 : vector<2x32xf32>
    %119 = arith.negf %118 : vector<2x32xf32>
    %120 = math.exp %119 : vector<2x32xf32>
    %cst_30 = arith.constant 1.000000e+00 : f32
    %121 = vector.broadcast %cst_30 : f32 to vector<2x32xf32>
    %122 = arith.addf %121, %120 : vector<2x32xf32>
    %123 = arith.divf %121, %122 : vector<2x32xf32>
    %124 = arith.addf %113, %116 : vector<2x32xf32>
    %125 = arith.negf %124 : vector<2x32xf32>
    %126 = math.exp %125 : vector<2x32xf32>
    %cst_31 = arith.constant 1.000000e+00 : f32
    %127 = vector.broadcast %cst_31 : f32 to vector<2x32xf32>
    %128 = arith.addf %127, %126 : vector<2x32xf32>
    %129 = arith.divf %127, %128 : vector<2x32xf32>
    %130 = arith.mulf %123, %117 : vector<2x32xf32>
    %131 = arith.addf %114, %130 : vector<2x32xf32>
    %132 = math.tanh %131 : vector<2x32xf32>
    %cst_32 = arith.constant 1.000000e+00 : f32
    %133 = vector.broadcast %cst_32 : f32 to vector<2x32xf32>
    %134 = arith.subf %133, %129 : vector<2x32xf32>
    %135 = arith.mulf %134, %132 : vector<2x32xf32>
    %136 = arith.mulf %129, %104 : vector<2x32xf32>
    %137 = arith.addf %135, %136 : vector<2x32xf32>
    %c3 = arith.constant 3 : index
    %c0_33 = arith.constant 0 : index
    %c0_34 = arith.constant 0 : index
    %138 = vector.load %arg12[%c3, %c0_33, %c0_34] : memref<7x2x32xf32, #tpu.memory_space<vmem>>, vector<1x2x32xf32>
    %139 = vector.shape_cast %138 : vector<1x2x32xf32> to vector<2x32xf32>
    %140 = vector.shape_cast %137 : vector<2x32xf32> to vector<1x2x32xf32>
    tpu.vector_store %arg12[%c3, %c0_33, %c0_34], %140 {strides = array<i32>} : memref<7x2x32xf32, #tpu.memory_space<vmem>>, vector<1x2x32xf32>,
    %141 = vector.extract_strided_slice %5 {offsets = [8, 0], sizes = [2, 96], strides = [1, 1]} : vector<14x96xf32> to vector<2x96xf32>
    %cst_35 = arith.constant dense<0.000000e+00> : vector<2x96xf32>
    %142 = tpu.matmul %137, %6, %cst_35 {dimension_numbers = #tpu.dot_dimension_numbers<[1], [0], [0], [1], [0, 0, 1, 1], [], []>} : vector<2x32xf32>, vector<32x96xf32>, vector<2x96xf32> -> vector<2x96xf32>
    %143 = vector.broadcast %7 : vector<1x96xf32> to vector<2x96xf32>
    %144 = arith.addf %142, %143 : vector<2x96xf32>
    %145 = vector.extract_strided_slice %141 {offsets = [0, 0], sizes = [2, 32], strides = [1, 1]} : vector<2x96xf32> to vector<2x32xf32>
    %146 = vector.extract_strided_slice %141 {offsets = [0, 32], sizes = [2, 32], strides = [1, 1]} : vector<2x96xf32> to vector<2x32xf32>
    %147 = vector.extract_strided_slice %141 {offsets = [0, 64], sizes = [2, 32], strides = [1, 1]} : vector<2x96xf32> to vector<2x32xf32>
    %148 = vector.extract_strided_slice %144 {offsets = [0, 0], sizes = [2, 32], strides = [1, 1]} : vector<2x96xf32> to vector<2x32xf32>
    %149 = vector.extract_strided_slice %144 {offsets = [0, 32], sizes = [2, 32], strides = [1, 1]} : vector<2x96xf32> to vector<2x32xf32>
    %150 = vector.extract_strided_slice %144 {offsets = [0, 64], sizes = [2, 32], strides = [1, 1]} : vector<2x96xf32> to vector<2x32xf32>
    %151 = arith.addf %145, %148 : vector<2x32xf32>
    %152 = arith.negf %151 : vector<2x32xf32>
    %153 = math.exp %152 : vector<2x32xf32>
    %cst_36 = arith.constant 1.000000e+00 : f32
    %154 = vector.broadcast %cst_36 : f32 to vector<2x32xf32>
    %155 = arith.addf %154, %153 : vector<2x32xf32>
    %156 = arith.divf %154, %155 : vector<2x32xf32>
    %157 = arith.addf %146, %149 : vector<2x32xf32>
    %158 = arith.negf %157 : vector<2x32xf32>
    %159 = math.exp %158 : vector<2x32xf32>
    %cst_37 = arith.constant 1.000000e+00 : f32
    %160 = vector.broadcast %cst_37 : f32 to vector<2x32xf32>
    %161 = arith.addf %160, %159 : vector<2x32xf32>
    %162 = arith.divf %160, %161 : vector<2x32xf32>
    %163 = arith.mulf %156, %150 : vector<2x32xf32>
    %164 = arith.addf %147, %163 : vector<2x32xf32>
    %165 = math.tanh %164 : vector<2x32xf32>
    %cst_38 = arith.constant 1.000000e+00 : f32
    %166 = vector.broadcast %cst_38 : f32 to vector<2x32xf32>
    %167 = arith.subf %166, %162 : vector<2x32xf32>
    %168 = arith.mulf %167, %165 : vector<2x32xf32>
    %169 = arith.mulf %162, %137 : vector<2x32xf32>
    %170 = arith.addf %168, %169 : vector<2x32xf32>
    %c4 = arith.constant 4 : index
    %c0_39 = arith.constant 0 : index
    %c0_40 = arith.constant 0 : index
    %171 = vector.load %arg12[%c4, %c0_39, %c0_40] : memref<7x2x32xf32, #tpu.memory_space<vmem>>, vector<1x2x32xf32>
    %172 = vector.shape_cast %171 : vector<1x2x32xf32> to vector<2x32xf32>
    %173 = vector.shape_cast %170 : vector<2x32xf32> to vector<1x2x32xf32>
    tpu.vector_store %arg12[%c4, %c0_39, %c0_40], %173 {strides = array<i32>} : memref<7x2x32xf32, #tpu.memory_space<vmem>>, vector<1x2x32xf32>,
    %174 = vector.extract_strided_slice %5 {offsets = [10, 0], sizes = [2, 96], strides = [1, 1]} : vector<14x96xf32> to vector<2x96xf32>
    %cst_41 = arith.constant dense<0.000000e+00> : vector<2x96xf32>
    %175 = tpu.matmul %170, %6, %cst_41 {dimension_numbers = #tpu.dot_dimension_numbers<[1], [0], [0], [1], [0, 0, 1, 1], [], []>} : vector<2x32xf32>, vector<32x96xf32>, vector<2x96xf32> -> vector<2x96xf32>
    %176 = vector.broadcast %7 : vector<1x96xf32> to vector<2x96xf32>
    %177 = arith.addf %175, %176 : vector<2x96xf32>
    %178 = vector.extract_strided_slice %174 {offsets = [0, 0], sizes = [2, 32], strides = [1, 1]} : vector<2x96xf32> to vector<2x32xf32>
    %179 = vector.extract_strided_slice %174 {offsets = [0, 32], sizes = [2, 32], strides = [1, 1]} : vector<2x96xf32> to vector<2x32xf32>
    %180 = vector.extract_strided_slice %174 {offsets = [0, 64], sizes = [2, 32], strides = [1, 1]} : vector<2x96xf32> to vector<2x32xf32>
    %181 = vector.extract_strided_slice %177 {offsets = [0, 0], sizes = [2, 32], strides = [1, 1]} : vector<2x96xf32> to vector<2x32xf32>
    %182 = vector.extract_strided_slice %177 {offsets = [0, 32], sizes = [2, 32], strides = [1, 1]} : vector<2x96xf32> to vector<2x32xf32>
    %183 = vector.extract_strided_slice %177 {offsets = [0, 64], sizes = [2, 32], strides = [1, 1]} : vector<2x96xf32> to vector<2x32xf32>
    %184 = arith.addf %178, %181 : vector<2x32xf32>
    %185 = arith.negf %184 : vector<2x32xf32>
    %186 = math.exp %185 : vector<2x32xf32>
    %cst_42 = arith.constant 1.000000e+00 : f32
    %187 = vector.broadcast %cst_42 : f32 to vector<2x32xf32>
    %188 = arith.addf %187, %186 : vector<2x32xf32>
    %189 = arith.divf %187, %188 : vector<2x32xf32>
    %190 = arith.addf %179, %182 : vector<2x32xf32>
    %191 = arith.negf %190 : vector<2x32xf32>
    %192 = math.exp %191 : vector<2x32xf32>
    %cst_43 = arith.constant 1.000000e+00 : f32
    %193 = vector.broadcast %cst_43 : f32 to vector<2x32xf32>
    %194 = arith.addf %193, %192 : vector<2x32xf32>
    %195 = arith.divf %193, %194 : vector<2x32xf32>
    %196 = arith.mulf %189, %183 : vector<2x32xf32>
    %197 = arith.addf %180, %196 : vector<2x32xf32>
    %198 = math.tanh %197 : vector<2x32xf32>
    %cst_44 = arith.constant 1.000000e+00 : f32
    %199 = vector.broadcast %cst_44 : f32 to vector<2x32xf32>
    %200 = arith.subf %199, %195 : vector<2x32xf32>
    %201 = arith.mulf %200, %198 : vector<2x32xf32>
    %202 = arith.mulf %195, %170 : vector<2x32xf32>
    %203 = arith.addf %201, %202 : vector<2x32xf32>
    %c5 = arith.constant 5 : index
    %c0_45 = arith.constant 0 : index
    %c0_46 = arith.constant 0 : index
    %204 = vector.load %arg12[%c5, %c0_45, %c0_46] : memref<7x2x32xf32, #tpu.memory_space<vmem>>, vector<1x2x32xf32>
    %205 = vector.shape_cast %204 : vector<1x2x32xf32> to vector<2x32xf32>
    %206 = vector.shape_cast %203 : vector<2x32xf32> to vector<1x2x32xf32>
    tpu.vector_store %arg12[%c5, %c0_45, %c0_46], %206 {strides = array<i32>} : memref<7x2x32xf32, #tpu.memory_space<vmem>>, vector<1x2x32xf32>,
    %207 = vector.extract_strided_slice %5 {offsets = [12, 0], sizes = [2, 96], strides = [1, 1]} : vector<14x96xf32> to vector<2x96xf32>
    %cst_47 = arith.constant dense<0.000000e+00> : vector<2x96xf32>
    %208 = tpu.matmul %203, %6, %cst_47 {dimension_numbers = #tpu.dot_dimension_numbers<[1], [0], [0], [1], [0, 0, 1, 1], [], []>} : vector<2x32xf32>, vector<32x96xf32>, vector<2x96xf32> -> vector<2x96xf32>
    %209 = vector.broadcast %7 : vector<1x96xf32> to vector<2x96xf32>
    %210 = arith.addf %208, %209 : vector<2x96xf32>
    %211 = vector.extract_strided_slice %207 {offsets = [0, 0], sizes = [2, 32], strides = [1, 1]} : vector<2x96xf32> to vector<2x32xf32>
    %212 = vector.extract_strided_slice %207 {offsets = [0, 32], sizes = [2, 32], strides = [1, 1]} : vector<2x96xf32> to vector<2x32xf32>
    %213 = vector.extract_strided_slice %207 {offsets = [0, 64], sizes = [2, 32], strides = [1, 1]} : vector<2x96xf32> to vector<2x32xf32>
    %214 = vector.extract_strided_slice %210 {offsets = [0, 0], sizes = [2, 32], strides = [1, 1]} : vector<2x96xf32> to vector<2x32xf32>
    %215 = vector.extract_strided_slice %210 {offsets = [0, 32], sizes = [2, 32], strides = [1, 1]} : vector<2x96xf32> to vector<2x32xf32>
    %216 = vector.extract_strided_slice %210 {offsets = [0, 64], sizes = [2, 32], strides = [1, 1]} : vector<2x96xf32> to vector<2x32xf32>
    %217 = arith.addf %211, %214 : vector<2x32xf32>
    %218 = arith.negf %217 : vector<2x32xf32>
    %219 = math.exp %218 : vector<2x32xf32>
    %cst_48 = arith.constant 1.000000e+00 : f32
    %220 = vector.broadcast %cst_48 : f32 to vector<2x32xf32>
    %221 = arith.addf %220, %219 : vector<2x32xf32>
    %222 = arith.divf %220, %221 : vector<2x32xf32>
    %223 = arith.addf %212, %215 : vector<2x32xf32>
    %224 = arith.negf %223 : vector<2x32xf32>
    %225 = math.exp %224 : vector<2x32xf32>
    %cst_49 = arith.constant 1.000000e+00 : f32
    %226 = vector.broadcast %cst_49 : f32 to vector<2x32xf32>
    %227 = arith.addf %226, %225 : vector<2x32xf32>
    %228 = arith.divf %226, %227 : vector<2x32xf32>
    %229 = arith.mulf %222, %216 : vector<2x32xf32>
    %230 = arith.addf %213, %229 : vector<2x32xf32>
    %231 = math.tanh %230 : vector<2x32xf32>
    %cst_50 = arith.constant 1.000000e+00 : f32
    %232 = vector.broadcast %cst_50 : f32 to vector<2x32xf32>
    %233 = arith.subf %232, %228 : vector<2x32xf32>
    %234 = arith.mulf %233, %231 : vector<2x32xf32>
    %235 = arith.mulf %228, %203 : vector<2x32xf32>
    %236 = arith.addf %234, %235 : vector<2x32xf32>
    %c6 = arith.constant 6 : index
    %c0_51 = arith.constant 0 : index
    %c0_52 = arith.constant 0 : index
    %237 = vector.load %arg12[%c6, %c0_51, %c0_52] : memref<7x2x32xf32, #tpu.memory_space<vmem>>, vector<1x2x32xf32>
    %238 = vector.shape_cast %237 : vector<1x2x32xf32> to vector<2x32xf32>
    %239 = vector.shape_cast %236 : vector<2x32xf32> to vector<1x2x32xf32>
    tpu.vector_store %arg12[%c6, %c0_51, %c0_52], %239 {strides = array<i32>} : memref<7x2x32xf32, #tpu.memory_space<vmem>>, vector<1x2x32xf32>,
    %c0_53 = arith.constant 0 : index
    %c0_54 = arith.constant 0 : index
    %c0_55 = arith.constant 0 : index
    %240 = vector.load %arg12[%c0_53, %c0_54, %c0_55] : memref<7x2x32xf32, #tpu.memory_space<vmem>>, vector<7x2x32xf32>
    %c0_56 = arith.constant 0 : index
    %c0_57 = arith.constant 0 : index
    %241 = vector.load %arg5[%c0_56, %c0_57] : memref<32x16xf32, #tpu.memory_space<vmem>>, vector<32x16xf32>
    "tpu.trace_start"() <{level = 10 : i32, message = "tbh,hk->tbk"}> : () -> ()
    %cst_58 = arith.constant dense<0.000000e+00> : vector<7x2x16xf32>
    %242 = tpu.matmul %240, %241, %cst_58 {dimension_numbers = #tpu.dot_dimension_numbers<[2], [0], [0, 1], [1], [0, 0, 0, 1, 1, 1], [], []>} : vector<7x2x32xf32>, vector<32x16xf32>, vector<7x2x16xf32> -> vector<7x2x16xf32>
    "tpu.trace_stop"() : () -> ()
    %c0_59 = arith.constant 0 : index
    %c0_60 = arith.constant 0 : index
    %243 = vector.load %arg6[%c0_59, %c0_60] : memref<1x16xf32, #tpu.memory_space<vmem>>, vector<1x16xf32>
    %244 = vector.shape_cast %243 : vector<1x16xf32> to vector<1x1x16xf32>
    %245 = vector.broadcast %244 : vector<1x1x16xf32> to vector<7x2x16xf32>
    %246 = arith.addf %242, %245 : vector<7x2x16xf32>
    %247 = math.tanh %246 : vector<7x2x16xf32>
    %c0_61 = arith.constant 0 : index
    %c0_62 = arith.constant 0 : index
    %248 = vector.load %arg7[%c0_61, %c0_62] : memref<16x1xf32, #tpu.memory_space<vmem>>, vector<16x1xf32>
    "tpu.trace_start"() <{level = 10 : i32, message = "tbk,ko->tbo"}> : () -> ()
    %cst_63 = arith.constant dense<0.000000e+00> : vector<7x2x1xf32>
    %249 = tpu.matmul %247, %248, %cst_63 {dimension_numbers = #tpu.dot_dimension_numbers<[2], [0], [0, 1], [1], [0, 0, 0, 1, 1, 1], [], []>} : vector<7x2x16xf32>, vector<16x1xf32>, vector<7x2x1xf32> -> vector<7x2x1xf32>
    "tpu.trace_stop"() : () -> ()
    %c0_64 = arith.constant 0 : index
    %c0_65 = arith.constant 0 : index
    %250 = vector.load %arg8[%c0_64, %c0_65] : memref<1x1xf32, #tpu.memory_space<vmem>>, vector<1x1xf32>
    %251 = vector.shape_cast %250 : vector<1x1xf32> to vector<1x1x1xf32>
    %252 = vector.broadcast %251 : vector<1x1x1xf32> to vector<7x2x1xf32>
    %253 = arith.addf %249, %252 : vector<7x2x1xf32>
    %cst_66 = arith.constant dense<0xFF800000> : vector<2x1xf32>
    %254 = vector.multi_reduction <maximumf>, %253, %cst_66 [0] : vector<7x2x1xf32> to vector<2x1xf32>
    %255 = vector.shape_cast %254 : vector<2x1xf32> to vector<1x2x1xf32>
    %256 = vector.broadcast %255 : vector<1x2x1xf32> to vector<7x2x1xf32>
    %257 = arith.subf %253, %256 : vector<7x2x1xf32>
    %258 = math.exp %257 : vector<7x2x1xf32>
    %cst_67 = arith.constant dense<0.000000e+00> : vector<2x1xf32>
    %259 = vector.multi_reduction <add>, %258, %cst_67 [0] : vector<7x2x1xf32> to vector<2x1xf32>
    %260 = vector.shape_cast %259 : vector<2x1xf32> to vector<1x2x1xf32>
    %261 = tpu.reciprocal %260 {approx = true} : vector<1x2x1xf32> -> vector<1x2x1xf32>
    %262 = vector.broadcast %261 : vector<1x2x1xf32> to vector<7x2x1xf32>
    %263 = arith.mulf %258, %262 : vector<7x2x1xf32>
    %264 = vector.broadcast %263 : vector<7x2x1xf32> to vector<7x2x32xf32>
    %265 = arith.mulf %240, %264 : vector<7x2x32xf32>
    %cst_68 = arith.constant dense<0.000000e+00> : vector<2x32xf32>
    %266 = vector.multi_reduction <add>, %265, %cst_68 [0] : vector<7x2x32xf32> to vector<2x32xf32>
    %c0_69 = arith.constant 0 : index
    %c0_70 = arith.constant 0 : index
    %267 = vector.load %arg9[%c0_69, %c0_70] : memref<32x4xf32, #tpu.memory_space<vmem>>, vector<32x4xf32>
    %cst_71 = arith.constant dense<0.000000e+00> : vector<2x4xf32>
    %268 = tpu.matmul %266, %267, %cst_71 {dimension_numbers = #tpu.dot_dimension_numbers<[1], [0], [0], [1], [0, 0, 1, 1], [], []>} : vector<2x32xf32>, vector<32x4xf32>, vector<2x4xf32> -> vector<2x4xf32>
    %c0_72 = arith.constant 0 : index
    %c0_73 = arith.constant 0 : index
    %269 = vector.load %arg10[%c0_72, %c0_73] : memref<1x4xf32, #tpu.memory_space<vmem>>, vector<1x4xf32>
    %270 = vector.broadcast %269 : vector<1x4xf32> to vector<2x4xf32>
    %271 = arith.addf %268, %270 : vector<2x4xf32>
    %c0_74 = arith.constant 0 : index
    %c0_75 = arith.constant 0 : index
    %272 = vector.load %arg11[%c0_74, %c0_75] : memref<2x4xf32, #tpu.memory_space<vmem>>, vector<2x4xf32>
    tpu.vector_store %arg11[%c0_74, %c0_75], %271 {strides = array<i32>} : memref<2x4xf32, #tpu.memory_space<vmem>>, vector<2x4xf32>,
    return
  }
}

</mosaic_0001>

<llo_original>
// kernel: crnn_forward.1
$region0: #{crnn_forward.1}
  #allocation0 [shape = 'u32[]', space=smem, size = 0x4, offset = 0x4, fixed_abs, tag = 'smem constant byte address 0x4 - core index']
  #allocation1 [shape = 'u32[72,128]{1,0:T(1,128)}', space=vmem, size = 0x9000, scoped, tag = 'internal scratch']
  #allocation2 [shape = 'f32[7,2,32]{2,1,0:T(2,128)}', space=vmem, size = 0x1c00, scoped, tag = 'scratch operand']
  #allocation3 [shape = 'f32[1,1]{1,0:T(1,128)S(1)}', space=vmem, size = 0x200, scoped, tag = 'scoped memory for crnn_forward.1']
  %s0 = inlined_call_operand.vmem [shape: f32[14,112], index: 0, kind: input, shape index: {}]
  %s1 = inlined_call_operand.vmem [shape: f32[112,96], index: 1, kind: input, shape index: {}]
  %s2 = inlined_call_operand.vmem [shape: f32[1,96], index: 2, kind: input, shape index: {}]
  %s3 = inlined_call_operand.vmem [shape: f32[32,96], index: 3, kind: input, shape index: {}]
  %s4 = inlined_call_operand.vmem [shape: f32[1,96], index: 4, kind: input, shape index: {}]
  %s5 = inlined_call_operand.vmem [shape: f32[32,16], index: 5, kind: input, shape index: {}]
  %s6 = inlined_call_operand.vmem [shape: f32[1,16], index: 6, kind: input, shape index: {}]
  %s7 = inlined_call_operand.vmem [shape: f32[16,1], index: 7, kind: input, shape index: {}]
  %s8 = inlined_call_operand.<no memory space> [shape: f32[1,1], index: 8, kind: input, shape index: {}]
  %s9 = inlined_call_operand.vmem [shape: f32[32,4], index: 9, kind: input, shape index: {}]
  %s10 = inlined_call_operand.vmem [shape: f32[1,4], index: 10, kind: input, shape index: {}]
  %s11 = inlined_call_operand.hbm [shape: f32[2,4], index: 11, kind: output, shape index: {}]
  %s12 = sld [smem:[#allocation0]]
  $region54: #{crnn_forward.1} parent=0
    _
  %s14 = ssub.s32 1, %s12
  %s15 = scalar_select 0, %s14, %s12
  %v16 = vstv %s8
  %17 = vst [vmem:[#allocation3] sm:$0x1] %v16
  $region1: #{crnn_forward.1} parent=0
    #allocation4 [shape = 'u8[1024]{0}', space=vmem, size = 0x400, scoped, tag = 'output window, operand 0, single buffered']
    #allocation5 [shape = 's32[1]{0}', space=sflag, size = 0x4, scoped, tag = 'scoped memory for crnn_forward.1']
    %18 = vsyncpa [#allocation5], 0
    // Predicated region
    $region2: #{crnn_forward.1} parent=1 // pred_check
      _
    $region3: #{crnn_forward.1} parent=1 // pred_check_branch
      %20 = sbr.rel (0) target = $region5
    $region4: #{crnn_forward.1} parent=1 // pred_region
      _
    $region5: #{crnn_forward.1} parent=1 // pred_fallthru
      _
    // Predicated region
    $region6: #{crnn_forward.1} parent=1 // pred_check
      _
    $region7: #{crnn_forward.1} parent=1 // pred_check_branch
      %22 = sbr.rel (0) target = $region9
    $region8: #{crnn_forward.1} parent=1 // pred_region
      _
    $region9: #{crnn_forward.1} parent=1 // pred_fallthru
      _
    // Predicated region
    $region10: #{crnn_forward.1} parent=1 // pred_check
      _
    $region11: #{crnn_forward.1} parent=1 // pred_check_branch
      %24 = sbr.rel (0) target = $region13
    $region12: #{crnn_forward.1} parent=1 // pred_region
      _
    $region13: #{crnn_forward.1} parent=1 // pred_fallthru
      _
    // Predicated region
    $region14: #{crnn_forward.1} parent=1 // pred_check
      _
    $region15: #{crnn_forward.1} parent=1 // pred_check_branch
      %26 = sbr.rel (0) target = $region17
    $region16: #{crnn_forward.1} parent=1 // pred_region
      _
    $region17: #{crnn_forward.1} parent=1 // pred_fallthru
      _
    // Predicated region
    $region18: #{crnn_forward.1} parent=1 // pred_check
      _
    $region19: #{crnn_forward.1} parent=1 // pred_check_branch
      %28 = sbr.rel (0) target = $region21
    $region20: #{crnn_forward.1} parent=1 // pred_region
      _
    $region21: #{crnn_forward.1} parent=1 // pred_fallthru
      _
    // Predicated region
    $region22: #{crnn_forward.1} parent=1 // pred_check
      _
    $region23: #{crnn_forward.1} parent=1 // pred_check_branch
      %30 = sbr.rel (0) target = $region25
    $region24: #{crnn_forward.1} parent=1 // pred_region
      _
    $region25: #{crnn_forward.1} parent=1 // pred_fallthru
      _
    // Predicated region
    $region26: #{crnn_forward.1} parent=1 // pred_check
      _
    $region27: #{crnn_forward.1} parent=1 // pred_check_branch
      %32 = sbr.rel (0) target = $region29
    $region28: #{crnn_forward.1} parent=1 // pred_region
      _
    $region29: #{crnn_forward.1} parent=1 // pred_fallthru
      _
    // Predicated region
    $region30: #{crnn_forward.1} parent=1 // pred_check
      _
    $region31: #{crnn_forward.1} parent=1 // pred_check_branch
      %34 = sbr.rel (0) target = $region33
    $region32: #{crnn_forward.1} parent=1 // pred_region
      _
    $region33: #{crnn_forward.1} parent=1 // pred_fallthru
      _
    // Predicated region
    $region34: #{crnn_forward.1} parent=1 // pred_check
      _
    $region35: #{crnn_forward.1} parent=1 // pred_check_branch
      %36 = sbr.rel (0) target = $region37
    $region36: #{crnn_forward.1} parent=1 // pred_region
      _
    $region37: #{crnn_forward.1} parent=1 // pred_fallthru
      _
    // Predicated region
    $region38: #{crnn_forward.1} parent=1 // pred_check
      _
    $region39: #{crnn_forward.1} parent=1 // pred_check_branch
      %38 = sbr.rel (0) target = $region41
    $region40: #{crnn_forward.1} parent=1 // pred_region
      _
    $region41: #{crnn_forward.1} parent=1 // pred_fallthru
      _
    // Predicated region
    $region42: #{crnn_forward.1} parent=1 // pred_check
      _
    $region43: #{crnn_forward.1} parent=1 // pred_check_branch
      %40 = sbr.rel (0) target = $region45
    $region44: #{crnn_forward.1} parent=1 // pred_region
      _
    $region45: #{crnn_forward.1} parent=1 // pred_fallthru
      _
    %v41 = vld [vmem:[%s0] sm:$0xff]
    %v42 = vld [vmem:[%s0 + $0x8] sm:$0x3f]
    %v43 = vld [vmem:[%s1] sm:$0xff]
    %v44 = vld [vmem:[%s1 + $0x8] sm:$0xff]
    %v45 = vld [vmem:[%s1 + $0x10] sm:$0xff]
    %v46 = vld [vmem:[%s1 + $0x18] sm:$0xff]
    %v47 = vld [vmem:[%s1 + $0x20] sm:$0xff]
    %v48 = vld [vmem:[%s1 + $0x28] sm:$0xff]
    %v49 = vld [vmem:[%s1 + $0x30] sm:$0xff]
    %v50 = vld [vmem:[%s1 + $0x38] sm:$0xff]
    %v51 = vld [vmem:[%s1 + $0x40] sm:$0xff]
    %v52 = vld [vmem:[%s1 + $0x48] sm:$0xff]
    %v53 = vld [vmem:[%s1 + $0x50] sm:$0xff]
    %v54 = vld [vmem:[%s1 + $0x58] sm:$0xff]
    %v55 = vld [vmem:[%s1 + $0x60] sm:$0xff]
    %v56 = vld [vmem:[%s1 + $0x68] sm:$0xff]
    %v57 = vld [vmem:[%s2] sm:$0x1]
    %v59 = vperm.slane %v57, 0
    %vm61 = vcmask 916480
    %v63 = vsel %vm61, %v41, 0
    %v66 = vsel %vm61, %v42, 0
    %68 = vmatpush.msra.mxu0 0.0
    %69 = vmatpush.msra.mxu0 0.0
    %70 = vmatpush.msra.mxu0 %v56
    %71 = vmatpush.msra.mxu0 %v55
    %72 = vmatpush.msra.mxu0 %v54
    %73 = vmatpush.msra.mxu0 %v53
    %74 = vmatpush.msra.mxu0 %v52
    %75 = vmatpush.msra.mxu0 %v51
    %76 = vmatpush.msra.mxu0 %v50
    %77 = vmatpush.msra.mxu0 %v49
    %78 = vmatpush.msra.mxu0 %v48
    %79 = vmatpush.msra.mxu0 %v47
    %80 = vmatpush.msra.mxu0 %v46
    %81 = vmatpush.msra.mxu0 %v45
    %82 = vmatpush.msra.mxu0 %v44
    %83 = vmatpush.msra.mxu0 %v43
    %84 = vmatmul.f32.gmra.mxu0 %v63
    %v85 = vpop.f32.mrf.mxu0
    %v86 = vadd.f32 %v59, %v85
    %87 = vmatmul.f32.gmra.mxu0 %v66
    %v88 = vpop.f32.mrf.mxu0
    %v89 = vadd.f32 %v59, %v88
    %90 = vdwg.mxu0
    %v91 = vld [vmem:[%s3] sm:$0xff]
    %v92 = vld [vmem:[%s3 + $0x8] sm:$0xff]
    %v93 = vld [vmem:[%s3 + $0x10] sm:$0xff]
    %v94 = vld [vmem:[%s3 + $0x18] sm:$0xff]
    %v95 = vld [vmem:[%s4] sm:$0x1]
    %v97 = vperm.slane %v95, 0
    %vm99 = vcmask 261120
    %v101 = vsel %vm99, 0.0, 0
    %103 = vmatpush.msra.mxu0 0.0
    %104 = vmatpush.msra.mxu0 0.0
    %105 = vmatpush.msra.mxu0 0.0
    %106 = vmatpush.msra.mxu0 0.0
    %107 = vmatpush.msra.mxu0 0.0
    %108 = vmatpush.msra.mxu0 0.0
    %109 = vmatpush.msra.mxu0 0.0
    %110 = vmatpush.msra.mxu0 0.0
    %111 = vmatpush.msra.mxu0 0.0
    %112 = vmatpush.msra.mxu0 0.0
    %113 = vmatpush.msra.mxu0 0.0
    %114 = vmatpush.msra.mxu0 0.0
    %115 = vmatpush.msra.mxu0 %v94
    %116 = vmatpush.msra.mxu0 %v93
    %117 = vmatpush.msra.mxu0 %v92
    %118 = vmatpush.msra.mxu0 %v91
    %119 = vmatmul.f32.gmra.mxu0 %v101
    %v120 = vpop.f32.mrf.mxu0
    %v121 = vadd.f32 %v97, %v120
    %122 = vdwg.mxu0
    %v123 = vadd.f32 %v86, %v121
    %v124 = vxor.u32 %v123, 2147483648
    %v125 = vmul.f32 %v124, 1.442695
    %v126 = vpow.pop %v125
    %v127 = vadd.f32 %v126, 1.0
    %v128 = vrcp.pop %v127
    %v129 = vmul.f32 %v127, %v128
    %v130 = vsub.f32 1.0, %v129
    %v131 = vmul.f32 %v128, %v130
    %v132 = vadd.f32 %v128, %v131
    %vm133 = vweird.f32 %v127
    %vm134 = vweird.f32 %v128
    %vm135 = vmor %vm133, %vm134
    %v136 = vsel %vm135, %v128, %v132
    %v137 = vand.u32 2147483647, %v127
    %vm138 = vcmp.eq.f32.partialorder %v137, 8.507059e+37
    %v139 = vand.u32 %v127, 2147483648
    %v140 = vor.u32 1.1754944e-38, %v139
    %v141 = vsel %vm138, %v140, %v136
    %v142 = vmul.f32 1.0, %v141
    %144 = vrot.lane.b32.xlu0 %v121, 64
    %v145 = vpop.permute.xlu0 %144
    %v147 = vmul.f32 %v142, %v145
    %149 = vrot.lane.b32.xlu0 %v147, 64
    %v150 = vpop.permute.xlu0 %149
    %v152 = vadd.f32 %v86, %v150
    %v153 = vtanh.pop %v152
    %v154 = vsub.f32 1.0, %v142
    %156 = vrot.lane.b32.xlu0 %v153, 96
    %v157 = vpop.permute.xlu0 %156
    %v159 = vmul.f32 %v154, %v157
    %v160 = vmul.f32 %v142, 0.0
    %v161 = vadd.f32 %v159, %v160
    %163 = vrot.lane.b32.xlu0 %v161, 96
    %v164 = vpop.permute.xlu0 %163
    %vm166 = vcmask 254976
    %167 = vst.msk [vmem:[#allocation2] sm:$0x3] %vm166, %v164
    %v168 = vsel %vm99, %v164, 0
    %170 = vmatpush.msra.mxu0 0.0
    %171 = vmatpush.msra.mxu0 0.0
    %172 = vmatpush.msra.mxu0 0.0
    %173 = vmatpush.msra.mxu0 0.0
    %174 = vmatpush.msra.mxu0 0.0
    %175 = vmatpush.msra.mxu0 0.0
    %176 = vmatpush.msra.mxu0 0.0
    %177 = vmatpush.msra.mxu0 0.0
    %178 = vmatpush.msra.mxu0 0.0
    %179 = vmatpush.msra.mxu0 0.0
    %180 = vmatpush.msra.mxu0 0.0
    %181 = vmatpush.msra.mxu0 0.0
    %182 = vmatpush.msra.mxu0 %v94
    %183 = vmatpush.msra.mxu0 %v93
    %184 = vmatpush.msra.mxu0 %v92
    %185 = vmatpush.msra.mxu0 %v91
    %186 = vmatmul.f32.gmra.mxu0 %v168
    %v187 = vpop.f32.mrf.mxu0
    %v188 = vadd.f32 %v97, %v187
    %189 = vdwg.mxu0
    %v191 = vrot.slane %v188, 6
    %v193 = vadd.f32 %v86, %v191
    %v194 = vxor.u32 %v193, 2147483648
    %v195 = vmul.f32 %v194, 1.442695
    %v196 = vpow.pop %v195
    %v197 = vadd.f32 %v196, 1.0
    %v198 = vrcp.pop %v197
    %v199 = vmul.f32 %v197, %v198
    %v200 = vsub.f32 1.0, %v199
    %v201 = vmul.f32 %v198, %v200
    %v202 = vadd.f32 %v198, %v201
    %vm203 = vweird.f32 %v197
    %vm204 = vweird.f32 %v198
    %vm205 = vmor %vm203, %vm204
    %v206 = vsel %vm205, %v198, %v202
    %v207 = vand.u32 2147483647, %v197
    %vm208 = vcmp.eq.f32.partialorder %v207, 8.507059e+37
    %v209 = vand.u32 %v197, 2147483648
    %v210 = vor.u32 1.1754944e-38, %v209
    %v211 = vsel %vm208, %v210, %v206
    %v212 = vmul.f32 1.0, %v211
    %213 = vrot.lane.b32.xlu0 %v191, 64
    %v214 = vpop.permute.xlu0 %213
    %v216 = vmul.f32 %v212, %v214
    %218 = vrot.lane.b32.xlu0 %v216, 64
    %v219 = vpop.permute.xlu0 %218
    %v221 = vadd.f32 %v86, %v219
    %v222 = vtanh.pop %v221
    %v223 = vsub.f32 1.0, %v212
    %225 = vrot.lane.b32.xlu0 %v222, 96
    %v226 = vpop.permute.xlu0 %225
    %v228 = vmul.f32 %v223, %v226
    %v229 = vrot.slane %v161, 6
    %v231 = vmul.f32 %v212, %v229
    %v232 = vadd.f32 %v228, %v231
    %234 = vrot.lane.b32.xlu0 %v232, 96
    %v235 = vpop.permute.xlu0 %234
    %s237 = scalar_lea.vmem [#allocation2], 2
    %vm238 = vcmask 257026
    %239 = vst.msk [vmem:[%s237 - $0x2] sm:$0xc] %vm238, %v235
    %v240 = vrot.slane %v232, 2
    %241 = vrot.lane.b32.xlu0 %v240, 96
    %v242 = vpop.permute.xlu0 %241
    %v243 = vsel %vm99, %v242, 0
    %245 = vmatpush.msra.mxu0 0.0
    %246 = vmatpush.msra.mxu0 0.0
    %247 = vmatpush.msra.mxu0 0.0
    %248 = vmatpush.msra.mxu0 0.0
    %249 = vmatpush.msra.mxu0 0.0
    %250 = vmatpush.msra.mxu0 0.0
    %251 = vmatpush.msra.mxu0 0.0
    %252 = vmatpush.msra.mxu0 0.0
    %253 = vmatpush.msra.mxu0 0.0
    %254 = vmatpush.msra.mxu0 0.0
    %255 = vmatpush.msra.mxu0 0.0
    %256 = vmatpush.msra.mxu0 0.0
    %257 = vmatpush.msra.mxu0 %v94
    %258 = vmatpush.msra.mxu0 %v93
    %259 = vmatpush.msra.mxu0 %v92
    %260 = vmatpush.msra.mxu0 %v91
    %261 = vmatmul.f32.gmra.mxu0 %v243
    %v262 = vpop.f32.mrf.mxu0
    %v263 = vadd.f32 %v97, %v262
    %264 = vdwg.mxu0
    %v266 = vrot.slane %v263, 4
    %v268 = vadd.f32 %v86, %v266
    %v269 = vxor.u32 %v268, 2147483648
    %v270 = vmul.f32 %v269, 1.442695
    %v271 = vpow.pop %v270
    %v272 = vadd.f32 %v271, 1.0
    %v273 = vrcp.pop %v272
    %v274 = vmul.f32 %v272, %v273
    %v275 = vsub.f32 1.0, %v274
    %v276 = vmul.f32 %v273, %v275
    %v277 = vadd.f32 %v273, %v276
    %vm278 = vweird.f32 %v272
    %vm279 = vweird.f32 %v273
    %vm280 = vmor %vm278, %vm279
    %v281 = vsel %vm280, %v273, %v277
    %v282 = vand.u32 2147483647, %v272
    %vm283 = vcmp.eq.f32.partialorder %v282, 8.507059e+37
    %v284 = vand.u32 %v272, 2147483648
    %v285 = vor.u32 1.1754944e-38, %v284
    %v286 = vsel %vm283, %v285, %v281
    %v287 = vmul.f32 1.0, %v286
    %288 = vrot.lane.b32.xlu0 %v266, 64
    %v289 = vpop.permute.xlu0 %288
    %v291 = vmul.f32 %v287, %v289
    %293 = vrot.lane.b32.xlu0 %v291, 64
    %v294 = vpop.permute.xlu0 %293
    %v296 = vadd.f32 %v86, %v294
    %v297 = vtanh.pop %v296
    %v298 = vsub.f32 1.0, %v287
    %300 = vrot.lane.b32.xlu0 %v297, 96
    %v301 = vpop.permute.xlu0 %300
    %v303 = vmul.f32 %v298, %v301
    %v304 = vrot.slane %v232, 6
    %v306 = vmul.f32 %v287, %v304
    %v307 = vadd.f32 %v303, %v306
    %309 = vrot.lane.b32.xlu0 %v307, 96
    %v310 = vpop.permute.xlu0 %309
    %s312 = scalar_lea.vmem [#allocation2], 4
    %vm313 = vcmask 259076
    %314 = vst.msk [vmem:[%s312 - $0x4] sm:$0x30] %vm313, %v310
    %v315 = vrot.slane %v307, 4
    %316 = vrot.lane.b32.xlu0 %v315, 96
    %v317 = vpop.permute.xlu0 %316
    %v318 = vsel %vm99, %v317, 0
    %320 = vmatpush.msra.mxu0 0.0
    %321 = vmatpush.msra.mxu0 0.0
    %322 = vmatpush.msra.mxu0 0.0
    %323 = vmatpush.msra.mxu0 0.0
    %324 = vmatpush.msra.mxu0 0.0
    %325 = vmatpush.msra.mxu0 0.0
    %326 = vmatpush.msra.mxu0 0.0
    %327 = vmatpush.msra.mxu0 0.0
    %328 = vmatpush.msra.mxu0 0.0
    %329 = vmatpush.msra.mxu0 0.0
    %330 = vmatpush.msra.mxu0 0.0
    %331 = vmatpush.msra.mxu0 0.0
    %332 = vmatpush.msra.mxu0 %v94
    %333 = vmatpush.msra.mxu0 %v93
    %334 = vmatpush.msra.mxu0 %v92
    %335 = vmatpush.msra.mxu0 %v91
    %336 = vmatmul.f32.gmra.mxu0 %v318
    %v337 = vpop.f32.mrf.mxu0
    %v338 = vadd.f32 %v97, %v337
    %339 = vdwg.mxu0
    %v341 = vrot.slane %v338, 2
    %v343 = vadd.f32 %v86, %v341
    %v344 = vxor.u32 %v343, 2147483648
    %v345 = vmul.f32 %v344, 1.442695
    %v346 = vpow.pop %v345
    %v347 = vadd.f32 %v346, 1.0
    %v348 = vrcp.pop %v347
    %v349 = vmul.f32 %v347, %v348
    %v350 = vsub.f32 1.0, %v349
    %v351 = vmul.f32 %v348, %v350
    %v352 = vadd.f32 %v348, %v351
    %vm353 = vweird.f32 %v347
    %vm354 = vweird.f32 %v348
    %vm355 = vmor %vm353, %vm354
    %v356 = vsel %vm355, %v348, %v352
    %v357 = vand.u32 2147483647, %v347
    %vm358 = vcmp.eq.f32.partialorder %v357, 8.507059e+37
    %v359 = vand.u32 %v347, 2147483648
    %v360 = vor.u32 1.1754944e-38, %v359
    %v361 = vsel %vm358, %v360, %v356
    %v362 = vmul.f32 1.0, %v361
    %363 = vrot.lane.b32.xlu0 %v341, 64
    %v364 = vpop.permute.xlu0 %363
    %v366 = vmul.f32 %v362, %v364
    %368 = vrot.lane.b32.xlu0 %v366, 64
    %v369 = vpop.permute.xlu0 %368
    %v371 = vadd.f32 %v86, %v369
    %v372 = vtanh.pop %v371
    %v373 = vsub.f32 1.0, %v362
    %375 = vrot.lane.b32.xlu0 %v372, 96
    %v376 = vpop.permute.xlu0 %375
    %v378 = vmul.f32 %v373, %v376
    %v379 = vrot.slane %v307, 6
    %v381 = vmul.f32 %v362, %v379
    %v382 = vadd.f32 %v378, %v381
    %384 = vrot.lane.b32.xlu0 %v382, 96
    %v385 = vpop.permute.xlu0 %384
    %s387 = scalar_lea.vmem [#allocation2], 6
    %vm388 = vcmask 261126
    %389 = vst.msk [vmem:[%s387 - $0x6] sm:$0xc0] %vm388, %v385
    %v390 = vrot.slane %v382, 6
    %391 = vrot.lane.b32.xlu0 %v390, 96
    %v392 = vpop.permute.xlu0 %391
    %v393 = vsel %vm99, %v392, 0
    %395 = vmatpush.msra.mxu0 0.0
    %396 = vmatpush.msra.mxu0 0.0
    %397 = vmatpush.msra.mxu0 0.0
    %398 = vmatpush.msra.mxu0 0.0
    %399 = vmatpush.msra.mxu0 0.0
    %400 = vmatpush.msra.mxu0 0.0
    %401 = vmatpush.msra.mxu0 0.0
    %402 = vmatpush.msra.mxu0 0.0
    %403 = vmatpush.msra.mxu0 0.0
    %404 = vmatpush.msra.mxu0 0.0
    %405 = vmatpush.msra.mxu0 0.0
    %406 = vmatpush.msra.mxu0 0.0
    %407 = vmatpush.msra.mxu0 %v94
    %408 = vmatpush.msra.mxu0 %v93
    %409 = vmatpush.msra.mxu0 %v92
    %410 = vmatpush.msra.mxu0 %v91
    %411 = vmatmul.f32.gmra.mxu0 %v393
    %v412 = vpop.f32.mrf.mxu0
    %v413 = vadd.f32 %v97, %v412
    %414 = vdwg.mxu0
    %v415 = vadd.f32 %v89, %v413
    %v416 = vxor.u32 %v415, 2147483648
    %v417 = vmul.f32 %v416, 1.442695
    %v418 = vpow.pop %v417
    %v419 = vadd.f32 %v418, 1.0
    %v420 = vrcp.pop %v419
    %v421 = vmul.f32 %v419, %v420
    %v422 = vsub.f32 1.0, %v421
    %v423 = vmul.f32 %v420, %v422
    %v424 = vadd.f32 %v420, %v423
    %vm425 = vweird.f32 %v419
    %vm426 = vweird.f32 %v420
    %vm427 = vmor %vm425, %vm426
    %v428 = vsel %vm427, %v420, %v424
    %v429 = vand.u32 2147483647, %v419
    %vm430 = vcmp.eq.f32.partialorder %v429, 8.507059e+37
    %v431 = vand.u32 %v419, 2147483648
    %v432 = vor.u32 1.1754944e-38, %v431
    %v433 = vsel %vm430, %v432, %v428
    %v434 = vmul.f32 1.0, %v433
    %436 = vrot.lane.b32.xlu0 %v413, 64
    %v437 = vpop.permute.xlu0 %436
    %v439 = vmul.f32 %v434, %v437
    %441 = vrot.lane.b32.xlu0 %v439, 64
    %v442 = vpop.permute.xlu0 %441
    %v444 = vadd.f32 %v89, %v442
    %v445 = vtanh.pop %v444
    %v446 = vsub.f32 1.0, %v434
    %448 = vrot.lane.b32.xlu0 %v445, 96
    %v449 = vpop.permute.xlu0 %448
    %v451 = vmul.f32 %v446, %v449
    %v453 = vmul.f32 %v434, %v390
    %v454 = vadd.f32 %v451, %v453
    %456 = vrot.lane.b32.xlu0 %v454, 96
    %v457 = vpop.permute.xlu0 %456
    %s459 = scalar_lea.vmem [#allocation2], 8
    %460 = vst.msk [vmem:[%s459] sm:$0x3] %vm166, %v457
    %v461 = vsel %vm99, %v457, 0
    %463 = vmatpush.msra.mxu0 0.0
    %464 = vmatpush.msra.mxu0 0.0
    %465 = vmatpush.msra.mxu0 0.0
    %466 = vmatpush.msra.mxu0 0.0
    %467 = vmatpush.msra.mxu0 0.0
    %468 = vmatpush.msra.mxu0 0.0
    %469 = vmatpush.msra.mxu0 0.0
    %470 = vmatpush.msra.mxu0 0.0
    %471 = vmatpush.msra.mxu0 0.0
    %472 = vmatpush.msra.mxu0 0.0
    %473 = vmatpush.msra.mxu0 0.0
    %474 = vmatpush.msra.mxu0 0.0
    %475 = vmatpush.msra.mxu0 %v94
    %476 = vmatpush.msra.mxu0 %v93
    %477 = vmatpush.msra.mxu0 %v92
    %478 = vmatpush.msra.mxu0 %v91
    %479 = vmatmul.f32.gmra.mxu0 %v461
    %v480 = vpop.f32.mrf.mxu0
    %v481 = vadd.f32 %v97, %v480
    %482 = vdwg.mxu0
    %v484 = vrot.slane %v481, 6
    %v486 = vadd.f32 %v89, %v484
    %v487 = vxor.u32 %v486, 2147483648
    %v488 = vmul.f32 %v487, 1.442695
    %v489 = vpow.pop %v488
    %v490 = vadd.f32 %v489, 1.0
    %v491 = vrcp.pop %v490
    %v492 = vmul.f32 %v490, %v491
    %v493 = vsub.f32 1.0, %v492
    %v494 = vmul.f32 %v491, %v493
    %v495 = vadd.f32 %v491, %v494
    %vm496 = vweird.f32 %v490
    %vm497 = vweird.f32 %v491
    %vm498 = vmor %vm496, %vm497
    %v499 = vsel %vm498, %v491, %v495
    %v500 = vand.u32 2147483647, %v490
    %vm501 = vcmp.eq.f32.partialorder %v500, 8.507059e+37
    %v502 = vand.u32 %v490, 2147483648
    %v503 = vor.u32 1.1754944e-38, %v502
    %v504 = vsel %vm501, %v503, %v499
    %v505 = vmul.f32 1.0, %v504
    %506 = vrot.lane.b32.xlu0 %v484, 64
    %v507 = vpop.permute.xlu0 %506
    %v509 = vmul.f32 %v505, %v507
    %511 = vrot.lane.b32.xlu0 %v509, 64
    %v512 = vpop.permute.xlu0 %511
    %v514 = vadd.f32 %v89, %v512
    %v515 = vtanh.pop %v514
    %v516 = vsub.f32 1.0, %v505
    %518 = vrot.lane.b32.xlu0 %v515, 96
    %v519 = vpop.permute.xlu0 %518
    %v521 = vmul.f32 %v516, %v519
    %v522 = vrot.slane %v454, 6
    %v524 = vmul.f32 %v505, %v522
    %v525 = vadd.f32 %v521, %v524
    %527 = vrot.lane.b32.xlu0 %v525, 96
    %v528 = vpop.permute.xlu0 %527
    %s530 = scalar_lea.vmem [#allocation2], 10
    %531 = vst.msk [vmem:[%s530 - $0x2] sm:$0xc] %vm238, %v528
    %v532 = vrot.slane %v525, 2
    %533 = vrot.lane.b32.xlu0 %v532, 96
    %v534 = vpop.permute.xlu0 %533
    %v535 = vsel %vm99, %v534, 0
    %537 = vmatpush.msra.mxu0 0.0
    %538 = vmatpush.msra.mxu0 0.0
    %539 = vmatpush.msra.mxu0 0.0
    %540 = vmatpush.msra.mxu0 0.0
    %541 = vmatpush.msra.mxu0 0.0
    %542 = vmatpush.msra.mxu0 0.0
    %543 = vmatpush.msra.mxu0 0.0
    %544 = vmatpush.msra.mxu0 0.0
    %545 = vmatpush.msra.mxu0 0.0
    %546 = vmatpush.msra.mxu0 0.0
    %547 = vmatpush.msra.mxu0 0.0
    %548 = vmatpush.msra.mxu0 0.0
    %549 = vmatpush.msra.mxu0 %v94
    %550 = vmatpush.msra.mxu0 %v93
    %551 = vmatpush.msra.mxu0 %v92
    %552 = vmatpush.msra.mxu0 %v91
    %553 = vmatmul.f32.gmra.mxu0 %v535
    %v554 = vpop.f32.mrf.mxu0
    %v555 = vadd.f32 %v97, %v554
    %556 = vdwg.mxu0
    %v558 = vrot.slane %v555, 4
    %v560 = vadd.f32 %v89, %v558
    %v561 = vxor.u32 %v560, 2147483648
    %v562 = vmul.f32 %v561, 1.442695
    %v563 = vpow.pop %v562
    %v564 = vadd.f32 %v563, 1.0
    %v565 = vrcp.pop %v564
    %v566 = vmul.f32 %v564, %v565
    %v567 = vsub.f32 1.0, %v566
    %v568 = vmul.f32 %v565, %v567
    %v569 = vadd.f32 %v565, %v568
    %vm570 = vweird.f32 %v564
    %vm571 = vweird.f32 %v565
    %vm572 = vmor %vm570, %vm571
    %v573 = vsel %vm572, %v565, %v569
    %v574 = vand.u32 2147483647, %v564
    %vm575 = vcmp.eq.f32.partialorder %v574, 8.507059e+37
    %v576 = vand.u32 %v564, 2147483648
    %v577 = vor.u32 1.1754944e-38, %v576
    %v578 = vsel %vm575, %v577, %v573
    %v579 = vmul.f32 1.0, %v578
    %580 = vrot.lane.b32.xlu0 %v558, 64
    %v581 = vpop.permute.xlu0 %580
    %v583 = vmul.f32 %v579, %v581
    %585 = vrot.lane.b32.xlu0 %v583, 64
    %v586 = vpop.permute.xlu0 %585
    %v588 = vadd.f32 %v89, %v586
    %v589 = vtanh.pop %v588
    %v590 = vsub.f32 1.0, %v579
    %592 = vrot.lane.b32.xlu0 %v589, 96
    %v593 = vpop.permute.xlu0 %592
    %v595 = vmul.f32 %v590, %v593
    %v596 = vrot.slane %v525, 6
    %v598 = vmul.f32 %v579, %v596
    %v599 = vadd.f32 %v595, %v598
    %601 = vrot.lane.b32.xlu0 %v599, 96
    %v602 = vpop.permute.xlu0 %601
    %s604 = scalar_lea.vmem [#allocation2], 12
    %605 = vst.msk [vmem:[%s604 - $0x4] sm:$0x30] %vm313, %v602
    %v606 = vld [vmem:[#allocation2] sm:$0x3]
    %v607 = vld [vmem:[#allocation2 + $0x2] sm:$0x3]
    %v608 = vld [vmem:[#allocation2 + $0x4] sm:$0x3]
    %v609 = vld [vmem:[#allocation2 + $0x6] sm:$0x3]
    %v610 = vld [vmem:[#allocation2 + $0x8] sm:$0x3]
    %v611 = vld [vmem:[#allocation2 + $0xa] sm:$0x3]
    %v612 = vld [vmem:[#allocation2 + $0xc] sm:$0x3]
    %v613 = vld [vmem:[%s5] sm:$0xff]
    %v614 = vld [vmem:[%s5 + $0x8] sm:$0xff]
    %v615 = vld [vmem:[%s5 + $0x10] sm:$0xff]
    %v616 = vld [vmem:[%s5 + $0x18] sm:$0xff]
    %v617 = vld [vmem:[%s6] sm:$0x1]
    %v619 = vperm.slane %v617, 0
    %627 = vst [vmem:[#allocation1] ss:$4 sm:$0xff] %v606
    %s628 = scalar_lea.vmem [#allocation1], 1
    %629 = vst [vmem:[%s628] ss:$4 sm:$0xff] %v607
    %s630 = scalar_lea.vmem [#allocation1], 2
    %631 = vst [vmem:[%s630] ss:$4 sm:$0xff] %v608
    %s632 = scalar_lea.vmem [#allocation1], 3
    %633 = vst [vmem:[%s632] ss:$4 sm:$0xff] %v609
    %s634 = scalar_lea.vmem [#allocation1], 32
    %635 = vst [vmem:[%s634] ss:$4 sm:$0xff] %v610
    %s636 = scalar_lea.vmem [#allocation1], 33
    %637 = vst [vmem:[%s636] ss:$4 sm:$0xff] %v611
    %s638 = scalar_lea.vmem [#allocation1], 34
    %639 = vst [vmem:[%s638] ss:$4 sm:$0xff] %v612
    %v640 = vld.sshfl [vmem:[#allocation1] sm:$0xff pattern:$0x73625140]
    %v641 = vld.sshfl [vmem:[#allocation1 + $0x20] sm:$0xff pattern:$0x73625140]
    %642 = vst [vmem:[#allocation1] ss:$4 sm:$0xff] %v619
    %s643 = scalar_lea.vmem [#allocation1], 1
    %644 = vst [vmem:[%s643] ss:$4 sm:$0xff] %v619
    %s645 = scalar_lea.vmem [#allocation1], 2
    %646 = vst [vmem:[%s645] ss:$4 sm:$0xff] %v619
    %s647 = scalar_lea.vmem [#allocation1], 3
    %648 = vst [vmem:[%s647] ss:$4 sm:$0xff] %v619
    %s649 = scalar_lea.vmem [#allocation1], 32
    %650 = vst [vmem:[%s649] ss:$4 sm:$0xff] %v619
    %s651 = scalar_lea.vmem [#allocation1], 33
    %652 = vst [vmem:[%s651] ss:$4 sm:$0xff] %v619
    %s653 = scalar_lea.vmem [#allocation1], 34
    %654 = vst [vmem:[%s653] ss:$4 sm:$0xff] %v619
    %v655 = vld.sshfl [vmem:[#allocation1] sm:$0xff pattern:$0x73625140]
    %v656 = vld.sshfl [vmem:[#allocation1 + $0x20] sm:$0xff pattern:$0x73625140]
    %v659 = vsel %vm99, %v640, 0
    %v661 = vsel %vm99, %v641, 0
    %663 = vmatpush.msra.mxu0 0.0
    %664 = vmatpush.msra.mxu0 0.0
    %665 = vmatpush.msra.mxu0 0.0
    %666 = vmatpush.msra.mxu0 0.0
    %667 = vmatpush.msra.mxu0 0.0
    %668 = vmatpush.msra.mxu0 0.0
    %669 = vmatpush.msra.mxu0 0.0
    %670 = vmatpush.msra.mxu0 0.0
    %671 = vmatpush.msra.mxu0 0.0
    %672 = vmatpush.msra.mxu0 0.0
    %673 = vmatpush.msra.mxu0 0.0
    %674 = vmatpush.msra.mxu0 0.0
    %675 = vmatpush.msra.mxu0 %v616
    %676 = vmatpush.msra.mxu0 %v615
    %677 = vmatpush.msra.mxu0 %v614
    %678 = vmatpush.msra.mxu0 %v613
    %679 = vmatmul.f32.gmra.mxu0 %v659
    %v680 = vpop.f32.mrf.mxu0
    %v681 = vadd.f32 %v655, %v680
    %682 = vmatmul.f32.gmra.mxu0 %v661
    %v683 = vpop.f32.mrf.mxu0
    %v684 = vadd.f32 %v656, %v683
    %685 = vdwg.mxu0
    %v688 = vrot.slane %v681, 2
    %v689 = vrot.slane %v681, 4
    %v690 = vrot.slane %v681, 6
    %v691 = vrot.slane %v684, 2
    %v692 = vrot.slane %v684, 4
    %v698 = vtanh.pop %v681
    %v699 = vtanh.pop %v688
    %v700 = vtanh.pop %v689
    %v701 = vtanh.pop %v690
    %v702 = vtanh.pop %v684
    %v703 = vtanh.pop %v691
    %v704 = vtanh.pop %v692
    %v705 = vld [vmem:[%s7] sm:$0xff]
    %v706 = vld [vmem:[%s7 + $0x8] sm:$0xff]
    %v707 = vld [vmem:[#allocation3] sm:$0x1]
    %v709 = vperm.slane %v707, 0
    %717 = vst [vmem:[#allocation1] ss:$4 sm:$0xff] %v698
    %s718 = scalar_lea.vmem [#allocation1], 1
    %719 = vst [vmem:[%s718] ss:$4 sm:$0xff] %v699
    %s720 = scalar_lea.vmem [#allocation1], 2
    %721 = vst [vmem:[%s720] ss:$4 sm:$0xff] %v700
    %s722 = scalar_lea.vmem [#allocation1], 3
    %723 = vst [vmem:[%s722] ss:$4 sm:$0xff] %v701
    %s724 = scalar_lea.vmem [#allocation1], 32
    %725 = vst [vmem:[%s724] ss:$4 sm:$0xff] %v702
    %s726 = scalar_lea.vmem [#allocation1], 33
    %727 = vst [vmem:[%s726] ss:$4 sm:$0xff] %v703
    %s728 = scalar_lea.vmem [#allocation1], 34
    %729 = vst [vmem:[%s728] ss:$4 sm:$0xff] %v704
    %v730 = vld.sshfl [vmem:[#allocation1] sm:$0xff pattern:$0x73625140]
    %v731 = vld.sshfl [vmem:[#allocation1 + $0x20] sm:$0xff pattern:$0x73625140]
    %732 = vst [vmem:[#allocation1] ss:$4 sm:$0xff] %v709
    %s733 = scalar_lea.vmem [#allocation1], 1
    %734 = vst [vmem:[%s733] ss:$4 sm:$0xff] %v709
    %s735 = scalar_lea.vmem [#allocation1], 2
    %736 = vst [vmem:[%s735] ss:$4 sm:$0xff] %v709
    %s737 = scalar_lea.vmem [#allocation1], 3
    %738 = vst [vmem:[%s737] ss:$4 sm:$0xff] %v709
    %s739 = scalar_lea.vmem [#allocation1], 32
    %740 = vst [vmem:[%s739] ss:$4 sm:$0xff] %v709
    %s741 = scalar_lea.vmem [#allocation1], 33
    %742 = vst [vmem:[%s741] ss:$4 sm:$0xff] %v709
    %s743 = scalar_lea.vmem [#allocation1], 34
    %744 = vst [vmem:[%s743] ss:$4 sm:$0xff] %v709
    %v745 = vld.sshfl [vmem:[#allocation1] sm:$0xff pattern:$0x73625140]
    %v746 = vld.sshfl [vmem:[#allocation1 + $0x20] sm:$0xff pattern:$0x73625140]
    %vm749 = vcmask 130048
    %v750 = vsel %vm749, %v730, 0
    %v752 = vsel %vm749, %v731, 0
    %754 = vmatpush.msra.mxu0 0.0
    %755 = vmatpush.msra.mxu0 0.0
    %756 = vmatpush.msra.mxu0 0.0
    %757 = vmatpush.msra.mxu0 0.0
    %758 = vmatpush.msra.mxu0 0.0
    %759 = vmatpush.msra.mxu0 0.0
    %760 = vmatpush.msra.mxu0 0.0
    %761 = vmatpush.msra.mxu0 0.0
    %762 = vmatpush.msra.mxu0 0.0
    %763 = vmatpush.msra.mxu0 0.0
    %764 = vmatpush.msra.mxu0 0.0
    %765 = vmatpush.msra.mxu0 0.0
    %766 = vmatpush.msra.mxu0 0.0
    %767 = vmatpush.msra.mxu0 0.0
    %768 = vmatpush.msra.mxu0 %v706
    %769 = vmatpush.msra.mxu0 %v705
    %770 = vmatmul.f32.gmra.mxu0 %v750
    %v771 = vpop.f32.mrf.mxu0
    %v772 = vadd.f32 %v745, %v771
    %773 = vmatmul.f32.gmra.mxu0 %v752
    %v774 = vpop.f32.mrf.mxu0
    %v775 = vadd.f32 %v746, %v774
    %776 = vdwg.mxu0
    %v779 = vrot.slane %v772, 2
    %v780 = vrot.slane %v772, 4
    %v781 = vrot.slane %v772, 6
    %v782 = vrot.slane %v775, 2
    %v783 = vrot.slane %v775, 4
    %vm789 = vcmask 1024
    %v790 = vsel %vm789, %v772, -inf
    %v791 = vsel %vm789, %v779, -inf
    %v792 = vsel %vm789, %v780, -inf
    %v793 = vsel %vm789, %v781, -inf
    %v794 = vsel %vm789, %v775, -inf
    %v795 = vmax.f32 %v790, %v794
    %v796 = vsel %vm789, %v782, -inf
    %v797 = vmax.f32 %v791, %v796
    %v798 = vsel %vm789, %v783, -inf
    %v799 = vmax.f32 %v792, %v798
    %v800 = vmax.f32 %v795, %v797
    %v801 = vmax.f32 %v799, %v793
    %v802 = vmax.f32 %v800, %v801
    %v803 = vsub.f32 %v772, %v802
    %v804 = vsub.f32 %v779, %v802
    %v805 = vsub.f32 %v780, %v802
    %v806 = vsub.f32 %v781, %v802
    %v807 = vsub.f32 %v775, %v802
    %v808 = vsub.f32 %v782, %v802
    %v809 = vsub.f32 %v783, %v802
    %v810 = vmul.f32 %v803, 1.442695
    %v811 = vpow.pop %v810
    %v812 = vmul.f32 %v804, 1.442695
    %v813 = vpow.pop %v812
    %v814 = vmul.f32 %v805, 1.442695
    %v815 = vpow.pop %v814
    %v816 = vmul.f32 %v806, 1.442695
    %v817 = vpow.pop %v816
    %v818 = vmul.f32 %v807, 1.442695
    %v819 = vpow.pop %v818
    %v820 = vmul.f32 %v808, 1.442695
    %v821 = vpow.pop %v820
    %v822 = vmul.f32 %v809, 1.442695
    %v823 = vpow.pop %v822
    %v824 = vsel %vm789, %v811, 0.0
    %v825 = vsel %vm789, %v813, 0.0
    %v826 = vadd.f32 %v824, %v825
    %v827 = vsel %vm789, %v815, 0.0
    %v828 = vadd.f32 %v826, %v827
    %v829 = vsel %vm789, %v817, 0.0
    %v830 = vadd.f32 %v828, %v829
    %v831 = vsel %vm789, %v819, 0.0
    %v832 = vadd.f32 %v830, %v831
    %v833 = vsel %vm789, %v821, 0.0
    %v834 = vadd.f32 %v832, %v833
    %v835 = vsel %vm789, %v823, 0.0
    %v836 = vadd.f32 %v834, %v835
    %v837 = vrcp.pop %v836
    %v838 = vmul.f32 %v811, %v837
    %v839 = vmul.f32 %v813, %v837
    %v840 = vmul.f32 %v815, %v837
    %v841 = vmul.f32 %v817, %v837
    %v842 = vmul.f32 %v819, %v837
    %v843 = vmul.f32 %v821, %v837
    %v844 = vmul.f32 %v823, %v837
    %846 = vset.pattern.permute.xlu0 0
    %847 = vperm.xlu0 %846, %v838
    %v848 = vpop.permute.xlu0 %847
    %v851 = vunpack.c.l.s4 269488144
    %v852 = vunpack.c.0.s8 %v851
    %v853 = vperm.slane %v848, %v852
    %855 = vset.pattern.permute.xlu0 0
    %856 = vperm.xlu0 %855, %v839
    %v857 = vpop.permute.xlu0 %856
    %v860 = vunpack.c.l.s4 269488144
    %v861 = vunpack.c.0.s8 %v860
    %v862 = vperm.slane %v857, %v861
    %864 = vset.pattern.permute.xlu0 0
    %865 = vperm.xlu0 %864, %v840
    %v866 = vpop.permute.xlu0 %865
    %v869 = vunpack.c.l.s4 269488144
    %v870 = vunpack.c.0.s8 %v869
    %v871 = vperm.slane %v866, %v870
    %873 = vset.pattern.permute.xlu0 0
    %874 = vperm.xlu0 %873, %v841
    %v875 = vpop.permute.xlu0 %874
    %v878 = vunpack.c.l.s4 269488144
    %v879 = vunpack.c.0.s8 %v878
    %v880 = vperm.slane %v875, %v879
    %882 = vset.pattern.permute.xlu0 0
    %883 = vperm.xlu0 %882, %v842
    %v884 = vpop.permute.xlu0 %883
    %v887 = vunpack.c.l.s4 269488144
    %v888 = vunpack.c.0.s8 %v887
    %v889 = vperm.slane %v884, %v888
    %891 = vset.pattern.permute.xlu0 0
    %892 = vperm.xlu0 %891, %v843
    %v893 = vpop.permute.xlu0 %892
    %v896 = vunpack.c.l.s4 269488144
    %v897 = vunpack.c.0.s8 %v896
    %v898 = vperm.slane %v893, %v897
    %900 = vset.pattern.permute.xlu0 0
    %901 = vperm.xlu0 %900, %v844
    %v902 = vpop.permute.xlu0 %901
    %v905 = vunpack.c.l.s4 269488144
    %v906 = vunpack.c.0.s8 %v905
    %v907 = vperm.slane %v902, %v906
    %v908 = vmul.f32 %v606, %v853
    %v909 = vmul.f32 %v607, %v862
    %v910 = vmul.f32 %v608, %v871
    %v911 = vmul.f32 %v609, %v880
    %v912 = vmul.f32 %v610, %v889
    %v913 = vmul.f32 %v611, %v898
    %v914 = vmul.f32 %v612, %v907
    %v915 = vsel %vm166, %v908, 0.0
    %v916 = vsel %vm166, %v909, 0.0
    %v917 = vadd.f32 %v915, %v916
    %v918 = vsel %vm166, %v910, 0.0
    %v919 = vadd.f32 %v917, %v918
    %v920 = vsel %vm166, %v911, 0.0
    %v921 = vadd.f32 %v919, %v920
    %v922 = vsel %vm166, %v912, 0.0
    %v923 = vadd.f32 %v921, %v922
    %v924 = vsel %vm166, %v913, 0.0
    %v925 = vadd.f32 %v923, %v924
    %v926 = vsel %vm166, %v914, 0.0
    %v927 = vadd.f32 %v925, %v926
    %v928 = vld [vmem:[%s9] sm:$0xff]
    %v929 = vld [vmem:[%s9 + $0x8] sm:$0xff]
    %v930 = vld [vmem:[%s9 + $0x10] sm:$0xff]
    %v931 = vld [vmem:[%s9 + $0x18] sm:$0xff]
    %v932 = vld [vmem:[%s10] sm:$0x1]
    %v934 = vperm.slane %v932, 0
    %v937 = vsel %vm99, %v927, 0
    %939 = vmatpush.msra.mxu0 0.0
    %940 = vmatpush.msra.mxu0 0.0
    %941 = vmatpush.msra.mxu0 0.0
    %942 = vmatpush.msra.mxu0 0.0
    %943 = vmatpush.msra.mxu0 0.0
    %944 = vmatpush.msra.mxu0 0.0
    %945 = vmatpush.msra.mxu0 0.0
    %946 = vmatpush.msra.mxu0 0.0
    %947 = vmatpush.msra.mxu0 0.0
    %948 = vmatpush.msra.mxu0 0.0
    %949 = vmatpush.msra.mxu0 0.0
    %950 = vmatpush.msra.mxu0 0.0
    %951 = vmatpush.msra.mxu0 %v931
    %952 = vmatpush.msra.mxu0 %v930
    %953 = vmatpush.msra.mxu0 %v929
    %954 = vmatpush.msra.mxu0 %v928
    %955 = vmatmul.f32.gmra.mxu0 %v937
    %v956 = vpop.f32.mrf.mxu0
    %v957 = vadd.f32 %v934, %v956
    %958 = vdwg.mxu0
    %vm959 = vcmask 25600
    %960 = vst.msk [vmem:[#allocation4] sm:$0x3] %vm959, %v957
    // Predicated region
    $region46: #{crnn_forward.1} parent=1 // pred_check
      _
    $region47: #{crnn_forward.1} parent=1 // pred_check_branch
      %962 = sbr.rel (0) target = $region49
    $region48: #{crnn_forward.1} parent=1 // pred_region
      %964 = vsyncadd [#allocation5], 0
      %s966 = sshll.u32 [#allocation4], 4
      %s967 = int_to_ptr.vmem [resolvable:$true] %s966
      %s968 = sshll.u32 %s11, 4
      %s969 = int_to_ptr.hbm [resolvable:$true] %s968
      %971 = dma.vmem_to_hbm [thread:$0]  %s967, 32, %s969, [#allocation5]
    $region49: #{crnn_forward.1} parent=1 // pred_fallthru
      _
    // Predicated region
    $region50: #{crnn_forward.1} parent=1 // pred_check
      _
    $region51: #{crnn_forward.1} parent=1 // pred_check_branch
      %973 = sbr.rel (0) target = $region53
    $region52: #{crnn_forward.1} parent=1 // pred_region
      %975 = dma.done [#allocation5], 32
    $region53: #{crnn_forward.1} parent=1 // pred_fallthru
      _
    %976 = vsyncpa [#allocation5], 1

</llo_original>
